<compile_context>
chip_gen: v7x
topology: tpu7x:2x2x1
jax: 0.10.0
libtpu: 0.0.40
codegen_flags: <defaults>
</compile_context>

<pallas_src>
import jax
import jax.numpy as jnp
from jax.experimental import pallas as pl
from jax.experimental.pallas import tpu as pltpu

NEG_SLOPE = 0.01   # nn.LeakyReLU default negative_slope
PACK = 4           # batch rows packed into the lane axis
ROW_MULT = 16      # packed-row tile granularity (safe for f32 and bf16 layouts)


def _leaky_relu(x):
    # single max + mul instead of compare+select -> fewer VALU slots per element
    return jnp.maximum(x, NEG_SLOPE * x)


def copd_kernel(x_ref, w1_ref, b1_ref, w2_ref, b2_ref, w3_ref, b3_ref, o_ref):
    # x arrives as f32 (single HBM read); cast to bf16 in-register for the MXU.
    x = x_ref[...].astype(jnp.bfloat16)

    # Packed Linear(in, fil) + LeakyReLU: (tbp, 4*in) @ blockdiag(W1 x4)
    h1 = jnp.dot(x, w1_ref[...], preferred_element_type=jnp.float32) + b1_ref[...]
    h1 = _leaky_relu(h1)

    # Packed Linear(fil, fil//4) + LeakyReLU: (tbp, 4*fil) @ blockdiag(W2 x4)
    h2 = jnp.dot(h1.astype(jnp.bfloat16), w2_ref[...],
                 preferred_element_type=jnp.float32) + b2_ref[...]
    h2 = _leaky_relu(h2)

    # Final Linear folded into one logit-difference column per packed row:
    #   d = h2 @ blockdiag(w3[:,0]-w3[:,1]) + (b3[0]-b3[1])
    d = jnp.dot(h2.astype(jnp.bfloat16), w3_ref[...],
                preferred_element_type=jnp.float32) + b3_ref[...]

    # 2-class softmax: softmax([a,b])[0] = sigmoid(a-b).
    # exp -> EUP; approx reciprocal -> EUP (vrcp), keeping the VALU free.
    p0 = pl.reciprocal(1.0 + jnp.exp(-d), approx=True)
    o_ref[...] = p0.astype(o_ref.dtype)


def _round_up(a, m):
    return (a + m - 1) // m * m


def _block_diag(w, n):
    """(k, m) -> (n*k, n*m) block-diagonal with w repeated on the diagonal."""
    return jnp.kron(jnp.eye(n, dtype=w.dtype), w)


def copd_forward(x, params, *, block_rows=8192):
    """x: (batch, in_size) float32. params: dict of weights/biases (see init_params)."""
    batch, in_size = x.shape

    w1, b1 = params["w1"], params["b1"]
    w2, b2 = params["w2"], params["b2"]
    w3, b3 = params["w3"], params["b3"]
    fil, mid, n_out = w1.shape[1], w2.shape[1], w3.shape[1]
    assert n_out == 2, "CopdModel always has 2 output classes"

    # --- block-diagonal packed weights (bf16 MXU operands, tiny -> VMEM resident) ---
    w1p = _block_diag(w1, PACK).astype(jnp.bfloat16)               # (4*in, 4*fil)
    w2p = _block_diag(w2, PACK).astype(jnp.bfloat16)               # (4*fil, 4*mid)
    w3d = w3[:, 0:1] - w3[:, 1:2]                                   # (mid, 1)
    w3p = _block_diag(w3d, PACK).astype(jnp.bfloat16)               # (4*mid, 4)
    b1p = jnp.tile(b1, (1, PACK)).astype(jnp.float32)                # (1, 4*fil)
    b2p = jnp.tile(b2, (1, PACK)).astype(jnp.float32)                # (1, 4*mid)
    b3p = jnp.full((1, PACK), b3[0, 0] - b3[0, 1], jnp.float32)      # (1, 4)

    # --- batch tiling: PACK rows per packed row, large tiles, >=2 tiles when possible ---
    p_rows = pl.cdiv(batch, PACK)                                    # packed rows needed
    tbp = _round_up(min(max(block_rows // PACK, ROW_MULT),
                        _round_up(p_rows, ROW_MULT)), ROW_MULT)
    if p_rows >= 2 * ROW_MULT:   # keep at least 2 grid tiles for v7x's 2 TensorCores
        tbp = min(tbp, _round_up(pl.cdiv(p_rows, 2), ROW_MULT))
    p_padded = _round_up(p_rows, tbp)
    padded_batch = p_padded * PACK

    xp = x
    if padded_batch != batch:
        xp = jnp.pad(xp, ((0, padded_batch - batch), (0, 0)))
    # Row-major reshape: packed row r holds original rows 4r..4r+3 (metadata-only).
    xp = xp.reshape(p_padded, PACK * in_size)

    grid = (p_padded // tbp,)
    const2d = lambda a: pl.BlockSpec(a.shape, lambda i: (0, 0))      # VMEM-resident

    kp, kf, km = PACK * in_size, PACK * fil, PACK * mid
    flops = 2 * p_padded * (kp * kf + kf * km + km * PACK)
    bytes_accessed = (p_padded * (kp + PACK) * 4
                      + (w1p.size + w2p.size + w3p.size) * 2
                      + (b1p.size + b2p.size + b3p.size) * 4)
    cost = pl.CostEstimate(flops=flops,
                           transcendentals=2 * p_padded * PACK,      # exp + vrcp
                           bytes_accessed=bytes_accessed)

    p0 = pl.pallas_call(
        copd_kernel,
        out_shape=jax.ShapeDtypeStruct((p_padded, PACK), jnp.float32),
        grid=grid,
        in_specs=[
            pl.BlockSpec((tbp, kp), lambda i: (i, 0)),   # packed x: tiled over batch
            const2d(w1p), const2d(b1p),
            const2d(w2p), const2d(b2p),
            const2d(w3p), const2d(b3p),
        ],
        out_specs=pl.BlockSpec((tbp, PACK), lambda i: (i, 0)),
        compiler_params=pltpu.CompilerParams(
            dimension_semantics=("parallel",),        # megacore sharding on v7x
            vmem_limit_bytes=32 * 1024 * 1024,        # tbp<=2048 packed rows: few MiB
        ),
        cost_estimate=cost,
    )(xp, w1p, b1p, w2p, b2p, w3p, b3p)

    # Unpack: (p_padded, 4) -> (padded_batch, 1) in original row order; p1 = 1 - p0.
    p0 = p0.reshape(padded_batch, 1)[:batch]
    return jnp.concatenate([p0, 1.0 - p0], axis=1)


def init_params(key, in_size, fil_num):
    """Deterministic synthetic init (PyTorch-style uniform fan-in bounds)."""
    ks = jax.random.split(key, 6)

    def linear(kw, kb, fan_in, fan_out):
        bound = 1.0 / jnp.sqrt(jnp.float32(fan_in))
        # Stored transposed: (in, out) so the forward does x @ W.
        w = jax.random.uniform(kw, (fan_in, fan_out), jnp.float32, -bound, bound)
        b = jax.random.uniform(kb, (1, fan_out), jnp.float32, -bound, bound)
        return w, b

    w1, b1 = linear(ks[0], ks[1], in_size, fil_num)
    w2, b2 = linear(ks[2], ks[3], fil_num, fil_num // 4)
    w3, b3 = linear(ks[4], ks[5], fil_num // 4, 2)
    return {"w1": w1, "b1": b1, "w2": w2, "b2": b2, "w3": w3, "b3": b3}


def reference_forward_kernel_path(x, p):
    """Mirrors the kernel numerics: bf16 matmuls, f32 accum, diff-column sigmoid."""
    w1 = p["w1"].astype(jnp.bfloat16)
    w2 = p["w2"].astype(jnp.bfloat16)
    w3d = (p["w3"][:, 0:1] - p["w3"][:, 1:2]).astype(jnp.bfloat16)
    b3d = p["b3"][0, 0] - p["b3"][0, 1]
    h1 = _leaky_relu(jnp.dot(x.astype(jnp.bfloat16), w1,
                             preferred_element_type=jnp.float32) + p["b1"])
    h2 = _leaky_relu(jnp.dot(h1.astype(jnp.bfloat16), w2,
                             preferred_element_type=jnp.float32) + p["b2"])
    d = jnp.dot(h2.astype(jnp.bfloat16), w3d,
                preferred_element_type=jnp.float32) + b3d
    p0 = jax.nn.sigmoid(d)
    return jnp.concatenate([p0, 1.0 - p0], axis=1)


def reference_forward_f32(x, p):
    """Exact-f32 reference matching the original PyTorch module semantics."""
    h1 = _leaky_relu(x @ p["w1"] + p["b1"])
    h2 = _leaky_relu(h1 @ p["w2"] + p["b2"])
    logits = h2 @ p["w3"] + p["b3"]
    return jax.nn.softmax(logits, axis=1)


if __name__ == "__main__":
    in_size = 32
    fil_num = 64
    batch = 8

    key = jax.random.PRNGKey(0)
    kx, kparams = jax.random.split(key)
    x = jax.random.normal(kx, (batch, in_size), jnp.float32)
    params = init_params(kparams, in_size, fil_num)

    out = jax.block_until_ready(copd_forward(x, params))

    ref_kernel_path = reference_forward_kernel_path(x, params)
    ref_f32 = reference_forward_f32(x, params)

    assert out.shape == (batch, 2)
    # Rows sum to 1 by construction (p1 = 1 - p0 in the wrapper).
    assert jnp.allclose(jnp.sum(out, axis=1), 1.0, atol=1e-6), "softmax rows must sum to 1"
    # Check against the matching bf16-matmul / sigmoid reference (approx-rcp slack).
    assert jnp.allclose(out, ref_kernel_path, atol=1e-2, rtol=1e-2), "mismatch vs bf16 reference"
    # Looser check against the exact-f32 PyTorch-equivalent reference.
    assert jnp.allclose(out, ref_f32, atol=3e-2, rtol=3e-2), "mismatch vs f32 reference"

    print("KERNEL_OK")
</pallas_src>

<mosaic_0001>
module attributes {stable_mosaic.version = 11 : i64} {
  func.func @copd_kernel(%arg0: i32, %arg1: memref<16x128xf32, #tpu.memory_space<vmem>>, %arg2: memref<128x256xbf16, #tpu.memory_space<vmem>>, %arg3: memref<1x256xf32, #tpu.memory_space<vmem>>, %arg4: memref<256x64xbf16, #tpu.memory_space<vmem>>, %arg5: memref<1x64xf32, #tpu.memory_space<vmem>>, %arg6: memref<64x4xbf16, #tpu.memory_space<vmem>>, %arg7: memref<1x4xf32, #tpu.memory_space<vmem>>, %arg8: memref<16x4xf32, #tpu.memory_space<vmem>>) attributes {dimension_semantics = [#tpu.dimension_semantics<parallel>], iteration_bounds = array<i64: 1>, scalar_prefetch = 0 : i64, scratch_operands = 0 : i64, tpu.core_type = #tpu.core_type<tc>, window_params = [{transform_indices = @transform_0, window_bounds = array<i64: 16, 128>}, {pipeline_mode = #tpu.pipeline_mode<synchronous>, transform_indices = @transform_1, window_bounds = array<i64: 128, 256>}, {pipeline_mode = #tpu.pipeline_mode<synchronous>, transform_indices = @transform_2, window_bounds = array<i64: 1, 256>}, {pipeline_mode = #tpu.pipeline_mode<synchronous>, transform_indices = @transform_3, window_bounds = array<i64: 256, 64>}, {pipeline_mode = #tpu.pipeline_mode<synchronous>, transform_indices = @transform_4, window_bounds = array<i64: 1, 64>}, {pipeline_mode = #tpu.pipeline_mode<synchronous>, transform_indices = @transform_5, window_bounds = array<i64: 64, 4>}, {pipeline_mode = #tpu.pipeline_mode<synchronous>, transform_indices = @transform_6, window_bounds = array<i64: 1, 4>}, {transform_indices = @transform_7, window_bounds = array<i64: 16, 4>}]} {
    %c0 = arith.constant 0 : index
    %c0_0 = arith.constant 0 : index
    %0 = vector.load %arg1[%c0, %c0_0] : memref<16x128xf32, #tpu.memory_space<vmem>>, vector<16x128xf32>
    %1 = arith.truncf %0 : vector<16x128xf32> to vector<16x128xbf16>
    %c0_1 = arith.constant 0 : index
    %c0_2 = arith.constant 0 : index
    %2 = vector.load %arg2[%c0_1, %c0_2] : memref<128x256xbf16, #tpu.memory_space<vmem>>, vector<128x256xbf16>
    %cst = arith.constant dense<0.000000e+00> : vector<16x256xf32>
    %3 = tpu.matmul %1, %2, %cst {dimension_numbers = #tpu.dot_dimension_numbers<[1], [0], [0], [1], [0, 0, 1, 1], [], []>} : vector<16x128xbf16>, vector<128x256xbf16>, vector<16x256xf32> -> vector<16x256xf32>
    %c0_3 = arith.constant 0 : index
    %c0_4 = arith.constant 0 : index
    %4 = vector.load %arg3[%c0_3, %c0_4] : memref<1x256xf32, #tpu.memory_space<vmem>>, vector<1x256xf32>
    %5 = vector.broadcast %4 : vector<1x256xf32> to vector<16x256xf32>
    %6 = arith.addf %3, %5 : vector<16x256xf32>
    %cst_5 = arith.constant 0.00999999977 : f32
    %7 = vector.broadcast %cst_5 : f32 to vector<16x256xf32>
    %8 = arith.mulf %7, %6 : vector<16x256xf32>
    %9 = arith.maximumf %6, %8 : vector<16x256xf32>
    %10 = arith.truncf %9 : vector<16x256xf32> to vector<16x256xbf16>
    %c0_6 = arith.constant 0 : index
    %c0_7 = arith.constant 0 : index
    %11 = vector.load %arg4[%c0_6, %c0_7] : memref<256x64xbf16, #tpu.memory_space<vmem>>, vector<256x64xbf16>
    %cst_8 = arith.constant dense<0.000000e+00> : vector<16x64xf32>
    %12 = tpu.matmul %10, %11, %cst_8 {dimension_numbers = #tpu.dot_dimension_numbers<[1], [0], [0], [1], [0, 0, 1, 1], [], []>} : vector<16x256xbf16>, vector<256x64xbf16>, vector<16x64xf32> -> vector<16x64xf32>
    %c0_9 = arith.constant 0 : index
    %c0_10 = arith.constant 0 : index
    %13 = vector.load %arg5[%c0_9, %c0_10] : memref<1x64xf32, #tpu.memory_space<vmem>>, vector<1x64xf32>
    %14 = vector.broadcast %13 : vector<1x64xf32> to vector<16x64xf32>
    %15 = arith.addf %12, %14 : vector<16x64xf32>
    %cst_11 = arith.constant 0.00999999977 : f32
    %16 = vector.broadcast %cst_11 : f32 to vector<16x64xf32>
    %17 = arith.mulf %16, %15 : vector<16x64xf32>
    %18 = arith.maximumf %15, %17 : vector<16x64xf32>
    %19 = arith.truncf %18 : vector<16x64xf32> to vector<16x64xbf16>
    %c0_12 = arith.constant 0 : index
    %c0_13 = arith.constant 0 : index
    %20 = vector.load %arg6[%c0_12, %c0_13] : memref<64x4xbf16, #tpu.memory_space<vmem>>, vector<64x4xbf16>
    %cst_14 = arith.constant dense<0.000000e+00> : vector<16x4xf32>
    %21 = tpu.matmul %19, %20, %cst_14 {dimension_numbers = #tpu.dot_dimension_numbers<[1], [0], [0], [1], [0, 0, 1, 1], [], []>} : vector<16x64xbf16>, vector<64x4xbf16>, vector<16x4xf32> -> vector<16x4xf32>
    %c0_15 = arith.constant 0 : index
    %c0_16 = arith.constant 0 : index
    %22 = vector.load %arg7[%c0_15, %c0_16] : memref<1x4xf32, #tpu.memory_space<vmem>>, vector<1x4xf32>
    %23 = vector.broadcast %22 : vector<1x4xf32> to vector<16x4xf32>
    %24 = arith.addf %21, %23 : vector<16x4xf32>
    %cst_17 = arith.constant 0.000000e+00 : f32
    %25 = vector.broadcast %cst_17 : f32 to vector<16x4xf32>
    %26 = arith.subf %25, %24 : vector<16x4xf32>
    %27 = math.exp %26 : vector<16x4xf32>
    %cst_18 = arith.constant 1.000000e+00 : f32
    %28 = vector.broadcast %cst_18 : f32 to vector<16x4xf32>
    %29 = arith.addf %28, %27 : vector<16x4xf32>
    %30 = tpu.reciprocal %29 {approx = true} : vector<16x4xf32> -> vector<16x4xf32>
    %c0_19 = arith.constant 0 : index
    %c0_20 = arith.constant 0 : index
    %31 = vector.load %arg8[%c0_19, %c0_20] : memref<16x4xf32, #tpu.memory_space<vmem>>, vector<16x4xf32>
    tpu.vector_store %arg8[%c0_19, %c0_20], %30 {strides = array<i32>} : memref<16x4xf32, #tpu.memory_space<vmem>>, vector<16x4xf32>,
    return
  }
  func.func @transform_0(%arg0: i32) -> (i32, i32) {
    %c0_i32 = arith.constant 0 : i32
    %c0_i32_0 = arith.constant 0 : i32
    return %arg0, %c0_i32 : i32, i32
  }
  func.func @transform_1(%arg0: i32) -> (i32, i32) {
    %c0_i32 = arith.constant 0 : i32
    %c0_i32_0 = arith.constant 0 : i32
    %c0_i32_1 = arith.constant 0 : i32
    return %c0_i32, %c0_i32_0 : i32, i32
  }
  func.func @transform_2(%arg0: i32) -> (i32, i32) {
    %c0_i32 = arith.constant 0 : i32
    %c0_i32_0 = arith.constant 0 : i32
    %c0_i32_1 = arith.constant 0 : i32
    return %c0_i32, %c0_i32_0 : i32, i32
  }
  func.func @transform_3(%arg0: i32) -> (i32, i32) {
    %c0_i32 = arith.constant 0 : i32
    %c0_i32_0 = arith.constant 0 : i32
    %c0_i32_1 = arith.constant 0 : i32
    return %c0_i32, %c0_i32_0 : i32, i32
  }
  func.func @transform_4(%arg0: i32) -> (i32, i32) {
    %c0_i32 = arith.constant 0 : i32
    %c0_i32_0 = arith.constant 0 : i32
    %c0_i32_1 = arith.constant 0 : i32
    return %c0_i32, %c0_i32_0 : i32, i32
  }
  func.func @transform_5(%arg0: i32) -> (i32, i32) {
    %c0_i32 = arith.constant 0 : i32
    %c0_i32_0 = arith.constant 0 : i32
    %c0_i32_1 = arith.constant 0 : i32
    return %c0_i32, %c0_i32_0 : i32, i32
  }
  func.func @transform_6(%arg0: i32) -> (i32, i32) {
    %c0_i32 = arith.constant 0 : i32
    %c0_i32_0 = arith.constant 0 : i32
    %c0_i32_1 = arith.constant 0 : i32
    return %c0_i32, %c0_i32_0 : i32, i32
  }
  func.func @transform_7(%arg0: i32) -> (i32, i32) {
    %c0_i32 = arith.constant 0 : i32
    %c0_i32_0 = arith.constant 0 : i32
    return %arg0, %c0_i32 : i32, i32
  }
}

</mosaic_0001>

<llo_original>
// kernel: tpu_custom_call.1
$region0: #{tpu_custom_call.1}
  #allocation0 [shape = 'u32[]', space=smem, size = 0x4, offset = 0x4, fixed_abs, tag = 'smem constant byte address 0x4 - core index']
  #allocation1 [shape = 'u32[144,128]{1,0:T(1,128)}', space=vmem, size = 0x12000, scoped, tag = 'internal scratch']
  %s0 = inlined_call_operand.vmem [shape: f32[16,128], index: 0, kind: input, shape index: {}]
  %s1 = inlined_call_operand.vmem [shape: bf16[128,256], index: 1, kind: input, shape index: {}]
  %s2 = inlined_call_operand.vmem [shape: f32[1,256], index: 2, kind: input, shape index: {}]
  %s3 = inlined_call_operand.vmem [shape: bf16[256,64], index: 3, kind: input, shape index: {}]
  %s4 = inlined_call_operand.vmem [shape: f32[1,64], index: 4, kind: input, shape index: {}]
  %s5 = inlined_call_operand.vmem [shape: bf16[64,4], index: 5, kind: input, shape index: {}]
  %s6 = inlined_call_operand.vmem [shape: f32[1,4], index: 6, kind: input, shape index: {}]
  %s7 = inlined_call_operand.vmem [shape: f32[16,4], index: 7, kind: output, shape index: {}]
  %s8 = sld [smem:[#allocation0]]
  $region38: #{tpu_custom_call.1} parent=0
    _
  %s10 = ssub.s32 1, %s8
  %s11 = scalar_select 0, %s10, %s8
  // Predicated region
  $region2: #{tpu_custom_call.1} parent=0 // pred_check
    _
  $region3: #{tpu_custom_call.1} parent=0 // pred_check_branch
    %13 = sbr.rel (0) target = $region5
  $region4: #{tpu_custom_call.1} parent=0 // pred_region
    _
  $region5: #{tpu_custom_call.1} parent=0 // pred_fallthru
    _
  // Predicated region
  $region6: #{tpu_custom_call.1} parent=0 // pred_check
    _
  $region7: #{tpu_custom_call.1} parent=0 // pred_check_branch
    %15 = sbr.rel (0) target = $region9
  $region8: #{tpu_custom_call.1} parent=0 // pred_region
    _
  $region9: #{tpu_custom_call.1} parent=0 // pred_fallthru
    _
  // Predicated region
  $region10: #{tpu_custom_call.1} parent=0 // pred_check
    _
  $region11: #{tpu_custom_call.1} parent=0 // pred_check_branch
    %17 = sbr.rel (0) target = $region13
  $region12: #{tpu_custom_call.1} parent=0 // pred_region
    _
  $region13: #{tpu_custom_call.1} parent=0 // pred_fallthru
    _
  // Predicated region
  $region14: #{tpu_custom_call.1} parent=0 // pred_check
    _
  $region15: #{tpu_custom_call.1} parent=0 // pred_check_branch
    %19 = sbr.rel (0) target = $region17
  $region16: #{tpu_custom_call.1} parent=0 // pred_region
    _
  $region17: #{tpu_custom_call.1} parent=0 // pred_fallthru
    _
  // Predicated region
  $region18: #{tpu_custom_call.1} parent=0 // pred_check
    _
  $region19: #{tpu_custom_call.1} parent=0 // pred_check_branch
    %21 = sbr.rel (0) target = $region21
  $region20: #{tpu_custom_call.1} parent=0 // pred_region
    _
  $region21: #{tpu_custom_call.1} parent=0 // pred_fallthru
    _
  // Predicated region
  $region22: #{tpu_custom_call.1} parent=0 // pred_check
    _
  $region23: #{tpu_custom_call.1} parent=0 // pred_check_branch
    %23 = sbr.rel (0) target = $region25
  $region24: #{tpu_custom_call.1} parent=0 // pred_region
    _
  $region25: #{tpu_custom_call.1} parent=0 // pred_fallthru
    _
  // Predicated region
  $region26: #{tpu_custom_call.1} parent=0 // pred_check
    _
  $region27: #{tpu_custom_call.1} parent=0 // pred_check_branch
    %25 = sbr.rel (0) target = $region29
  $region28: #{tpu_custom_call.1} parent=0 // pred_region
    _
  $region29: #{tpu_custom_call.1} parent=0 // pred_fallthru
    _
  %v27 = vld [vmem:[%s0] sm:$0xff]
  %v28 = vld [vmem:[%s0 + $0x8] sm:$0xff]
  %v29 = vpack.c.bf16 %v28, %v27
  %v30 = vld [vmem:[%s1] sm:$0xff]
  %v31 = vld [vmem:[%s1 + $0x8] sm:$0xff]
  %v32 = vld [vmem:[%s1 + $0x10] sm:$0xff]
  %v33 = vld [vmem:[%s1 + $0x18] sm:$0xff]
  %v34 = vld [vmem:[%s1 + $0x20] sm:$0xff]
  %v35 = vld [vmem:[%s1 + $0x28] sm:$0xff]
  %v36 = vld [vmem:[%s1 + $0x30] sm:$0xff]
  %v37 = vld [vmem:[%s1 + $0x38] sm:$0xff]
  %v38 = vld [vmem:[%s1 + $0x40] sm:$0xff]
  %v39 = vld [vmem:[%s1 + $0x48] sm:$0xff]
  %v40 = vld [vmem:[%s1 + $0x50] sm:$0xff]
  %v41 = vld [vmem:[%s1 + $0x58] sm:$0xff]
  %v42 = vld [vmem:[%s1 + $0x60] sm:$0xff]
  %v43 = vld [vmem:[%s1 + $0x68] sm:$0xff]
  %v44 = vld [vmem:[%s1 + $0x70] sm:$0xff]
  %v45 = vld [vmem:[%s1 + $0x78] sm:$0xff]
  %v46 = vld [vmem:[%s2] sm:$0x3]
  %v48 = vlaneseq
  %v49 = vshrl.u32 %v48, 7
  %v50 = vsub.s32 0, %v49
  %v51 = vrot.slane %v46, %v50
  %v52 = vlaneseq
  %v53 = vshrl.u32 %v52, 7
  %v54 = vsub.s32 1, %v53
  %v55 = vrot.slane %v46, %v54
  %v74 = vunpack.c.l.b16 %v30
  %v75 = vunpack.c.h.b16 %v30
  %v76 = vunpack.c.l.b16 %v31
  %v77 = vunpack.c.h.b16 %v31
  %v78 = vunpack.c.l.b16 %v32
  %v79 = vunpack.c.h.b16 %v32
  %v80 = vunpack.c.l.b16 %v33
  %v81 = vunpack.c.h.b16 %v33
  %v82 = vunpack.c.l.b16 %v34
  %v83 = vunpack.c.h.b16 %v34
  %v84 = vunpack.c.l.b16 %v35
  %v85 = vunpack.c.h.b16 %v35
  %v86 = vunpack.c.l.b16 %v36
  %v87 = vunpack.c.h.b16 %v36
  %v88 = vunpack.c.l.b16 %v37
  %v89 = vunpack.c.h.b16 %v37
  %v90 = vunpack.c.l.b16 %v38
  %v91 = vunpack.c.h.b16 %v38
  %v92 = vunpack.c.l.b16 %v39
  %v93 = vunpack.c.h.b16 %v39
  %v94 = vunpack.c.l.b16 %v40
  %v95 = vunpack.c.h.b16 %v40
  %v96 = vunpack.c.l.b16 %v41
  %v97 = vunpack.c.h.b16 %v41
  %v98 = vunpack.c.l.b16 %v42
  %v99 = vunpack.c.h.b16 %v42
  %v100 = vunpack.c.l.b16 %v43
  %v101 = vunpack.c.h.b16 %v43
  %v102 = vunpack.c.l.b16 %v44
  %v103 = vunpack.c.h.b16 %v44
  %v104 = vunpack.c.l.b16 %v45
  %v105 = vunpack.c.h.b16 %v45
  %v106 = vpack.c.b16 %v76, %v74
  %v107 = vpack.c.b16 %v77, %v75
  %v108 = vpack.c.b16 %v80, %v78
  %v109 = vpack.c.b16 %v81, %v79
  %v110 = vpack.c.b16 %v84, %v82
  %v111 = vpack.c.b16 %v85, %v83
  %v112 = vpack.c.b16 %v88, %v86
  %v113 = vpack.c.b16 %v89, %v87
  %v114 = vpack.c.b16 %v92, %v90
  %v115 = vpack.c.b16 %v93, %v91
  %v116 = vpack.c.b16 %v96, %v94
  %v117 = vpack.c.b16 %v97, %v95
  %v118 = vpack.c.b16 %v100, %v98
  %v119 = vpack.c.b16 %v101, %v99
  %v120 = vpack.c.b16 %v104, %v102
  %v121 = vpack.c.b16 %v105, %v103
  %138 = vmatprep.subr.bf16.mxu0 %v107
  %139 = vmatpush1.bf16.msra.mxu0 %v106
  %140 = vmatprep.subr.bf16.mxu0 %v109
  %141 = vmatpush1.bf16.msra.mxu0 %v108
  %142 = vmatprep.subr.bf16.mxu0 %v111
  %143 = vmatpush1.bf16.msra.mxu0 %v110
  %144 = vmatprep.subr.bf16.mxu0 %v113
  %145 = vmatpush1.bf16.msra.mxu0 %v112
  %146 = vmatprep.subr.bf16.mxu0 %v115
  %147 = vmatpush1.bf16.msra.mxu0 %v114
  %148 = vmatprep.subr.bf16.mxu0 %v117
  %149 = vmatpush1.bf16.msra.mxu0 %v116
  %150 = vmatprep.subr.bf16.mxu0 %v119
  %151 = vmatpush1.bf16.msra.mxu0 %v118
  %152 = vmatprep.subr.bf16.mxu0 %v121
  %153 = vmatpush1.bf16.msra.mxu0 %v120
  %154 = vmatprep.subr.bf16.mxu0 0
  %155 = vmatpush1.bf16.msra.mxu0 0
  %156 = vmatprep.subr.bf16.mxu0 0
  %157 = vmatpush1.bf16.msra.mxu0 0
  %158 = vmatprep.subr.bf16.mxu0 0
  %159 = vmatpush1.bf16.msra.mxu0 0
  %160 = vmatprep.subr.bf16.mxu0 0
  %161 = vmatpush1.bf16.msra.mxu0 0
  %162 = vmatprep.subr.bf16.mxu0 0
  %163 = vmatpush1.bf16.msra.mxu0 0
  %164 = vmatprep.subr.bf16.mxu0 0
  %165 = vmatpush1.bf16.msra.mxu0 0
  %166 = vmatprep.subr.bf16.mxu0 0
  %167 = vmatpush1.bf16.msra.mxu0 0
  %168 = vmatprep.subr.bf16.mxu0 0
  %169 = vmatpush1.bf16.msra.mxu0 0
  %170 = vmatprep.mubr.bf16.mxu0 0
  %171 = vmatmul.mubr.bf16.gmra.mrb[0].mxu0 %v29
  %v172 = vpop.f32.mrb[0].mxu0
  %v173 = vadd.f32 %v51, %v172
  %v174 = vpop.f32.mrb[0].mxu0
  %v175 = vadd.f32 %v55, %v174
  %v176 = vpop.f32.mrb[0].mxu0
  %v177 = vadd.f32 %v51, %v176
  %v178 = vpop.f32.mrb[0].mxu0
  %v179 = vadd.f32 %v55, %v178
  %180 = vdwg.mxu0
  %v181 = vmul.f32 %v173, 0.01
  %v182 = vmul.f32 %v175, 0.01
  %v183 = vmul.f32 %v177, 0.01
  %v184 = vmul.f32 %v179, 0.01
  %v185 = vmax.f32 %v173, %v181
  %v186 = vmax.f32 %v175, %v182
  %v187 = vmax.f32 %v177, %v183
  %v188 = vmax.f32 %v179, %v184
  %v189 = vpack.c.bf16 %v187, %v185
  %v190 = vpack.c.bf16 %v188, %v186
  %v191 = vld [vmem:[%s3] sm:$0xf]
  %v192 = vld [vmem:[%s3 + $0x4] sm:$0xf]
  %v193 = vld [vmem:[%s3 + $0x8] sm:$0xf]
  %v194 = vld [vmem:[%s3 + $0xc] sm:$0xf]
  %v195 = vld [vmem:[%s3 + $0x10] sm:$0xf]
  %v196 = vld [vmem:[%s3 + $0x14] sm:$0xf]
  %v197 = vld [vmem:[%s3 + $0x18] sm:$0xf]
  %v198 = vld [vmem:[%s3 + $0x1c] sm:$0xf]
  %v199 = vld [vmem:[%s3 + $0x20] sm:$0xf]
  %v200 = vld [vmem:[%s3 + $0x24] sm:$0xf]
  %v201 = vld [vmem:[%s3 + $0x28] sm:$0xf]
  %v202 = vld [vmem:[%s3 + $0x2c] sm:$0xf]
  %v203 = vld [vmem:[%s3 + $0x30] sm:$0xf]
  %v204 = vld [vmem:[%s3 + $0x34] sm:$0xf]
  %v205 = vld [vmem:[%s3 + $0x38] sm:$0xf]
  %v206 = vld [vmem:[%s3 + $0x3c] sm:$0xf]
  %v207 = vld [vmem:[%s3 + $0x40] sm:$0xf]
  %v208 = vld [vmem:[%s3 + $0x44] sm:$0xf]
  %v209 = vld [vmem:[%s3 + $0x48] sm:$0xf]
  %v210 = vld [vmem:[%s3 + $0x4c] sm:$0xf]
  %v211 = vld [vmem:[%s3 + $0x50] sm:$0xf]
  %v212 = vld [vmem:[%s3 + $0x54] sm:$0xf]
  %v213 = vld [vmem:[%s3 + $0x58] sm:$0xf]
  %v214 = vld [vmem:[%s3 + $0x5c] sm:$0xf]
  %v215 = vld [vmem:[%s3 + $0x60] sm:$0xf]
  %v216 = vld [vmem:[%s3 + $0x64] sm:$0xf]
  %v217 = vld [vmem:[%s3 + $0x68] sm:$0xf]
  %v218 = vld [vmem:[%s3 + $0x6c] sm:$0xf]
  %v219 = vld [vmem:[%s3 + $0x70] sm:$0xf]
  %v220 = vld [vmem:[%s3 + $0x74] sm:$0xf]
  %v221 = vld [vmem:[%s3 + $0x78] sm:$0xf]
  %v222 = vld [vmem:[%s3 + $0x7c] sm:$0xf]
  %v223 = vld [vmem:[%s4] sm:$0x1]
  %v225 = vlaneseq
  %v226 = vshrl.u32 %v225, 7
  %v227 = vsub.s32 0, %v226
  %v228 = vrot.slane %v223, %v227
  %v262 = vunpack.c.l.b16 %v191
  %v263 = vunpack.c.l.b16 %v192
  %v264 = vunpack.c.l.b16 %v193
  %v265 = vunpack.c.l.b16 %v194
  %v266 = vunpack.c.l.b16 %v195
  %v267 = vunpack.c.l.b16 %v196
  %v268 = vunpack.c.l.b16 %v197
  %v269 = vunpack.c.l.b16 %v198
  %v270 = vunpack.c.l.b16 %v199
  %v271 = vunpack.c.l.b16 %v200
  %v272 = vunpack.c.l.b16 %v201
  %v273 = vunpack.c.l.b16 %v202
  %v274 = vunpack.c.l.b16 %v203
  %v275 = vunpack.c.l.b16 %v204
  %v276 = vunpack.c.l.b16 %v205
  %v277 = vunpack.c.l.b16 %v206
  %v278 = vunpack.c.l.b16 %v207
  %v279 = vunpack.c.l.b16 %v208
  %v280 = vunpack.c.l.b16 %v209
  %v281 = vunpack.c.l.b16 %v210
  %v282 = vunpack.c.l.b16 %v211
  %v283 = vunpack.c.l.b16 %v212
  %v284 = vunpack.c.l.b16 %v213
  %v285 = vunpack.c.l.b16 %v214
  %v286 = vunpack.c.l.b16 %v215
  %v287 = vunpack.c.l.b16 %v216
  %v288 = vunpack.c.l.b16 %v217
  %v289 = vunpack.c.l.b16 %v218
  %v290 = vunpack.c.l.b16 %v219
  %v291 = vunpack.c.l.b16 %v220
  %v292 = vunpack.c.l.b16 %v221
  %v293 = vunpack.c.l.b16 %v222
  %v294 = vpack.c.b16 %v263, %v262
  %v295 = vpack.c.b16 %v265, %v264
  %v296 = vpack.c.b16 %v267, %v266
  %v297 = vpack.c.b16 %v269, %v268
  %v298 = vpack.c.b16 %v271, %v270
  %v299 = vpack.c.b16 %v273, %v272
  %v300 = vpack.c.b16 %v275, %v274
  %v301 = vpack.c.b16 %v277, %v276
  %v302 = vpack.c.b16 %v279, %v278
  %v303 = vpack.c.b16 %v281, %v280
  %v304 = vpack.c.b16 %v283, %v282
  %v305 = vpack.c.b16 %v285, %v284
  %v306 = vpack.c.b16 %v287, %v286
  %v307 = vpack.c.b16 %v289, %v288
  %v308 = vpack.c.b16 %v291, %v290
  %v309 = vpack.c.b16 %v293, %v292
  %326 = vmatprep.subr.bf16.mxu0 0
  %327 = vmatpush1.bf16.msra.mxu0 %v294
  %328 = vmatprep.subr.bf16.mxu0 0
  %329 = vmatpush1.bf16.msra.mxu0 %v295
  %330 = vmatprep.subr.bf16.mxu0 0
  %331 = vmatpush1.bf16.msra.mxu0 %v296
  %332 = vmatprep.subr.bf16.mxu0 0
  %333 = vmatpush1.bf16.msra.mxu0 %v297
  %334 = vmatprep.subr.bf16.mxu0 0
  %335 = vmatpush1.bf16.msra.mxu0 %v298
  %336 = vmatprep.subr.bf16.mxu0 0
  %337 = vmatpush1.bf16.msra.mxu0 %v299
  %338 = vmatprep.subr.bf16.mxu0 0
  %339 = vmatpush1.bf16.msra.mxu0 %v300
  %340 = vmatprep.subr.bf16.mxu0 0
  %341 = vmatpush1.bf16.msra.mxu0 %v301
  %342 = vmatprep.subr.bf16.mxu0 0
  %343 = vmatpush1.bf16.msra.mxu0 %v302
  %344 = vmatprep.subr.bf16.mxu0 0
  %345 = vmatpush1.bf16.msra.mxu0 %v303
  %346 = vmatprep.subr.bf16.mxu0 0
  %347 = vmatpush1.bf16.msra.mxu0 %v304
  %348 = vmatprep.subr.bf16.mxu0 0
  %349 = vmatpush1.bf16.msra.mxu0 %v305
  %350 = vmatprep.subr.bf16.mxu0 0
  %351 = vmatpush1.bf16.msra.mxu0 %v306
  %352 = vmatprep.subr.bf16.mxu0 0
  %353 = vmatpush1.bf16.msra.mxu0 %v307
  %354 = vmatprep.subr.bf16.mxu0 0
  %355 = vmatpush1.bf16.msra.mxu0 %v308
  %356 = vmatprep.subr.bf16.mxu0 0
  %357 = vmatpush1.bf16.msra.mxu0 %v309
  %358 = vmatprep.mubr.bf16.mxu0 %v190
  %359 = vmatmul.mubr.bf16.gmra.mrb[0].mxu0 %v189
  %v360 = vpop.f32.mrb[0].mxu0
  %v361 = vadd.f32 %v228, %v360
  %v362 = vpop.f32.mrb[0].mxu0
  %v363 = vpop.f32.mrb[0].mxu0
  %v364 = vadd.f32 %v228, %v363
  %v365 = vpop.f32.mrb[0].mxu0
  %366 = vdwg.mxu0
  %v367 = vmul.f32 %v361, 0.01
  %v368 = vmul.f32 %v364, 0.01
  %v369 = vmax.f32 %v361, %v367
  %v370 = vmax.f32 %v364, %v368
  %v371 = vpack.c.bf16 %v370, %v369
  %v372 = vld [vmem:[%s5] sm:$0xf]
  %v373 = vld [vmem:[%s5 + $0x4] sm:$0xf]
  %v374 = vld [vmem:[%s5 + $0x8] sm:$0xf]
  %v375 = vld [vmem:[%s5 + $0xc] sm:$0xf]
  %v376 = vld [vmem:[%s5 + $0x10] sm:$0xf]
  %v377 = vld [vmem:[%s5 + $0x14] sm:$0xf]
  %v378 = vld [vmem:[%s5 + $0x18] sm:$0xf]
  %v379 = vld [vmem:[%s5 + $0x1c] sm:$0xf]
  %v380 = vld [vmem:[%s6] sm:$0x1]
  %v382 = vlaneseq
  %v383 = vshrl.u32 %v382, 7
  %v384 = vsub.s32 0, %v383
  %v385 = vrot.slane %v380, %v384
  %v395 = vunpack.c.l.b16 %v372
  %v396 = vunpack.c.l.b16 %v373
  %v397 = vunpack.c.l.b16 %v374
  %v398 = vunpack.c.l.b16 %v375
  %v399 = vunpack.c.l.b16 %v376
  %v400 = vunpack.c.l.b16 %v377
  %v401 = vunpack.c.l.b16 %v378
  %v402 = vunpack.c.l.b16 %v379
  %v403 = vpack.c.b16 %v396, %v395
  %v404 = vpack.c.b16 %v398, %v397
  %v405 = vpack.c.b16 %v400, %v399
  %v406 = vpack.c.b16 %v402, %v401
  %vm411 = vcmask 523264
  %v413 = vsel %vm411, %v371, 0
  %415 = vmatprep.subr.bf16.mxu0 0
  %416 = vmatpush1.bf16.msra.mxu0 %v403
  %417 = vmatprep.subr.bf16.mxu0 0
  %418 = vmatpush1.bf16.msra.mxu0 %v404
  %419 = vmatprep.subr.bf16.mxu0 0
  %420 = vmatpush1.bf16.msra.mxu0 %v405
  %421 = vmatprep.subr.bf16.mxu0 0
  %422 = vmatpush1.bf16.msra.mxu0 %v406
  %423 = vmatprep.subr.bf16.mxu0 0
  %424 = vmatpush1.bf16.msra.mxu0 0
  %425 = vmatprep.subr.bf16.mxu0 0
  %426 = vmatpush1.bf16.msra.mxu0 0
  %427 = vmatprep.subr.bf16.mxu0 0
  %428 = vmatpush1.bf16.msra.mxu0 0
  %429 = vmatprep.subr.bf16.mxu0 0
  %430 = vmatpush1.bf16.msra.mxu0 0
  %431 = vmatprep.subr.bf16.mxu0 0
  %432 = vmatpush1.bf16.msra.mxu0 0
  %433 = vmatprep.subr.bf16.mxu0 0
  %434 = vmatpush1.bf16.msra.mxu0 0
  %435 = vmatprep.subr.bf16.mxu0 0
  %436 = vmatpush1.bf16.msra.mxu0 0
  %437 = vmatprep.subr.bf16.mxu0 0
  %438 = vmatpush1.bf16.msra.mxu0 0
  %439 = vmatprep.subr.bf16.mxu0 0
  %440 = vmatpush1.bf16.msra.mxu0 0
  %441 = vmatprep.subr.bf16.mxu0 0
  %442 = vmatpush1.bf16.msra.mxu0 0
  %443 = vmatprep.subr.bf16.mxu0 0
  %444 = vmatpush1.bf16.msra.mxu0 0
  %445 = vmatprep.subr.bf16.mxu0 0
  %446 = vmatpush1.bf16.msra.mxu0 0
  %447 = vmatprep.mubr.bf16.mxu0 0
  %448 = vmatmul.mubr.bf16.gmra.mrb[0].mxu0 %v413
  %v449 = vpop.f32.mrb[0].mxu0
  %v450 = vadd.f32 %v385, %v449
  %v451 = vpop.f32.mrb[0].mxu0
  %v452 = vpop.f32.mrb[0].mxu0
  %v453 = vadd.f32 %v385, %v452
  %v454 = vpop.f32.mrb[0].mxu0
  %455 = vdwg.mxu0
  %v456 = vsub.f32 0.0, %v450
  %v457 = vsub.f32 0.0, %v453
  %v458 = vmul.f32 %v456, 1.442695
  %v459 = vpow.pop %v458
  %v460 = vmul.f32 %v457, 1.442695
  %v461 = vpow.pop %v460
  %v462 = vadd.f32 %v459, 1.0
  %v463 = vadd.f32 %v461, 1.0
  %v464 = vrcp.pop %v462
  %v465 = vrcp.pop %v463
  %vm466 = vcmask 31744
  %467 = vst.msk [vmem:[%s7] sm:$0xff] %vm466, %v464
  %468 = vst.msk [vmem:[%s7 + $0x8] sm:$0xff] %vm466, %v465
  // Predicated region
  $region30: #{tpu_custom_call.1} parent=0 // pred_check
    _
  $region31: #{tpu_custom_call.1} parent=0 // pred_check_branch
    %470 = sbr.rel (0) target = $region33
  $region32: #{tpu_custom_call.1} parent=0 // pred_region
    _
  $region33: #{tpu_custom_call.1} parent=0 // pred_fallthru
    _
  // Predicated region
  $region34: #{tpu_custom_call.1} parent=0 // pred_check
    _
  $region35: #{tpu_custom_call.1} parent=0 // pred_check_branch
    %472 = sbr.rel (0) target = $region37
  $region36: #{tpu_custom_call.1} parent=0 // pred_region
    _
  $region37: #{tpu_custom_call.1} parent=0 // pred_fallthru
    _

</llo_original>
